<compile_context>
chip_gen: v7x
topology: tpu7x:2x2x1
jax: 0.10.0
libtpu: 0.0.40
codegen_flags: <defaults>
</compile_context>

<pallas_src>
import functools

import jax
import jax.numpy as jnp
import numpy as np
from jax.experimental import pallas as pl
from jax.experimental.pallas import tpu as pltpu


# ---------------------------------------------------------------------------
# Pallas kernel: one MeanAggregator application on a tile of nodes.
#   self_ref  : [tn, D]          node embeddings
#   neigh_ref : [tn, F*D]        flattened sampled neighbor embeddings
#   wself_ref : [D,   2H]        [self_W | 0]
#   wneigh_ref: [F*D, 2H]        F stacked copies of [0 | neigh_W / F]  (mean folded in)
#   out_ref   : [tn, 2H]         concat([self@self_W, mean(neigh)@neigh_W], axis=1)
# ---------------------------------------------------------------------------
def _mean_agg_kernel(self_ref, neigh_ref, wself_ref, wneigh_ref, out_ref, *, apply_relu):
    # Single fused expression: the zero-padded weights have disjoint column support, so the
    # sum of the two dots IS the concatenation; the neighbor mean happens inside the second
    # dot's K=F*D contraction (no XLU reduction, no lane concat, no extra VMEM temp).
    out = (jnp.dot(self_ref[...], wself_ref[...], preferred_element_type=jnp.float32)
           + jnp.dot(neigh_ref[...], wneigh_ref[...], preferred_element_type=jnp.float32))
    if apply_relu:
        out = jnp.maximum(out, 0.0)
    out_ref[...] = out.astype(out_ref.dtype)


def _round_up(x, m):
    return ((x + m - 1) // m) * m


@functools.partial(jax.jit, static_argnames=("apply_relu", "max_tile"))
def mean_aggregator_forward(self_emb, neigh_emb, self_W, neigh_W,
                            apply_relu=False, max_tile=1024):
    """Pallas-backed MeanAggregator.forward (activation restricted to None / ReLU)."""
    N, D = self_emb.shape
    _, fanout, _ = neigh_emb.shape
    H = self_W.shape[1]
    in_dtype = self_emb.dtype

    # Flatten neighbors: metadata-only reshape of a contiguous array (no HBM traffic).
    neigh_flat = neigh_emb.reshape(N, fanout * D)

    # Fused weights (tiny, built once per call):
    #   w_self  = [self_W | 0]                      -> left  H output columns
    #   w_neigh = tile_F([0 | neigh_W * (1/F)])     -> right H output columns, mean via K dim
    wz = jnp.zeros((D, H), jnp.float32)
    w_self = jnp.concatenate([self_W.astype(jnp.float32), wz], axis=1)                     # [D, 2H]
    w_n = jnp.concatenate([wz, neigh_W.astype(jnp.float32) * (1.0 / fanout)], axis=1)      # [D, 2H]
    w_neigh = jnp.tile(w_n, (fanout, 1))                                                   # [F*D, 2H]
    # Keep MXU operands homogeneous with the inputs (bf16 inputs stay bf16; acc is f32).
    w_self = w_self.astype(in_dtype)
    w_neigh = w_neigh.astype(in_dtype)

    # Node tile: as large as max_tile, but keep >= 2 grid steps when N allows so the
    # "parallel" axis shards across both TensorCores on v7x.  No padding: the partial
    # edge block is masked by Pallas on writeback (op is purely row-wise, so the stale
    # rows in the last input block only produce discarded output rows).
    tn = max(8, min(int(max_tile), _round_up(-(-N // 2), 8)))
    grid = (pl.cdiv(N, tn),)

    kernel = functools.partial(_mean_agg_kernel, apply_relu=apply_relu)
    out = pl.pallas_call(
        kernel,
        out_shape=jax.ShapeDtypeStruct((N, 2 * H), in_dtype),
        grid_spec=pltpu.PrefetchScalarGridSpec(
            num_scalar_prefetch=0,
            grid=grid,
            in_specs=[
                pl.BlockSpec((tn, D), lambda i: (i, 0)),
                pl.BlockSpec((tn, fanout * D), lambda i: (i, 0)),
                pl.BlockSpec((D, 2 * H), lambda i: (0, 0)),           # weights stay VMEM-resident
                pl.BlockSpec((fanout * D, 2 * H), lambda i: (0, 0)),
            ],
            out_specs=pl.BlockSpec((tn, 2 * H), lambda i: (i, 0)),
        ),
        compiler_params=pltpu.CompilerParams(dimension_semantics=("parallel",)),
    )(self_emb, neigh_flat, w_self, w_neigh)
    return out


# ---------------------------------------------------------------------------
# Pure-JAX reference (mirrors the PyTorch module exactly) for sanity checking.
# ---------------------------------------------------------------------------
def _reference_forward(self_emb, neigh_emb, self_W, neigh_W, apply_relu):
    agg = jnp.mean(neigh_emb, axis=1)
    fs = self_emb @ self_W
    fn = agg @ neigh_W
    if apply_relu:
        fs = jnp.maximum(fs, 0.0)
        fn = jnp.maximum(fn, 0.0)
    return jnp.concatenate([fs, fn], axis=1)


def xavier_uniform(key, shape):
    fan_in, fan_out = shape
    bound = float(np.sqrt(6.0 / (fan_in + fan_out)))
    return jax.random.uniform(key, shape, jnp.float32, minval=-bound, maxval=bound)


# TODO(synk): arbitrary `activation` callables from the PyTorch module are not supported in the
# kernel; only None / elementwise ReLU are handled (via the static `apply_relu` flag).

if __name__ == "__main__":
    dim = 32            # MeanAggregator(dim) -> weights [dim, dim // 2]
    H = dim // 2
    fanout = 5
    n_nodes = 203       # not a multiple of the tile: exercises the masked edge block

    key = jax.random.PRNGKey(0)
    k_self, k_neigh, k_ws, k_wn = jax.random.split(key, 4)

    self_emb = jax.random.normal(k_self, (n_nodes, dim), jnp.float32)
    neigh_emb = jax.random.normal(k_neigh, (n_nodes, fanout, dim), jnp.float32)
    self_W = xavier_uniform(k_ws, (dim, H))
    neigh_W = xavier_uniform(k_wn, (dim, H))

    # Case 1: ReLU activation, f32, 2-step parallel grid (both TCs on v7x), masked edge block.
    out = mean_aggregator_forward(self_emb, neigh_emb, self_W, neigh_W, apply_relu=True)
    out = jax.block_until_ready(out)
    ref = _reference_forward(self_emb, neigh_emb, self_W, neigh_W, apply_relu=True)
    assert out.shape == (n_nodes, dim), out.shape
    np.testing.assert_allclose(np.asarray(out), np.asarray(ref), rtol=1e-3, atol=1e-3)

    # Case 2: no activation, forced multi-step grid with a partial last block.
    n_big = 1200
    kb_self, kb_neigh = jax.random.split(jax.random.PRNGKey(1), 2)
    self_big = jax.random.normal(kb_self, (n_big, dim), jnp.float32)
    neigh_big = jax.random.normal(kb_neigh, (n_big, fanout, dim), jnp.float32)
    out2 = mean_aggregator_forward(self_big, neigh_big, self_W, neigh_W,
                                   apply_relu=False, max_tile=256)
    out2 = jax.block_until_ready(out2)
    ref2 = _reference_forward(self_big, neigh_big, self_W, neigh_W, apply_relu=False)
    assert out2.shape == (n_big, dim), out2.shape
    np.testing.assert_allclose(np.asarray(out2), np.asarray(ref2), rtol=1e-3, atol=1e-3)

    # Case 3: bf16 inputs (memory-bound win); f32 accumulation inside the kernel.
    out3 = mean_aggregator_forward(self_emb.astype(jnp.bfloat16),
                                   neigh_emb.astype(jnp.bfloat16),
                                   self_W, neigh_W, apply_relu=True)
    out3 = jax.block_until_ready(out3)
    assert out3.dtype == jnp.bfloat16 and out3.shape == (n_nodes, dim)
    np.testing.assert_allclose(np.asarray(out3, dtype=np.float32), np.asarray(ref),
                               rtol=5e-2, atol=5e-2)

    print("KERNEL_OK")
</pallas_src>

<mosaic_0001>
module attributes {stable_mosaic.version = 11 : i64} {
  func.func @_mean_agg_kernel(%arg0: i32, %arg1: memref<104x32xf32, #tpu.memory_space<vmem>>, %arg2: memref<104x160xf32, #tpu.memory_space<vmem>>, %arg3: memref<32x32xf32, #tpu.memory_space<vmem>>, %arg4: memref<160x32xf32, #tpu.memory_space<vmem>>, %arg5: memref<104x32xf32, #tpu.memory_space<vmem>>) attributes {dimension_semantics = [#tpu.dimension_semantics<parallel>], iteration_bounds = array<i64: 2>, scalar_prefetch = 0 : i64, scratch_operands = 0 : i64, tpu.core_type = #tpu.core_type<tc>, window_params = [{transform_indices = @transform_0, window_bounds = array<i64: 104, 32>}, {transform_indices = @transform_1, window_bounds = array<i64: 104, 160>}, {pipeline_mode = #tpu.pipeline_mode<synchronous>, transform_indices = @transform_2, window_bounds = array<i64: 32, 32>}, {pipeline_mode = #tpu.pipeline_mode<synchronous>, transform_indices = @transform_3, window_bounds = array<i64: 160, 32>}, {transform_indices = @transform_4, window_bounds = array<i64: 104, 32>}]} {
    %c0 = arith.constant 0 : index
    %c0_0 = arith.constant 0 : index
    %0 = vector.load %arg1[%c0, %c0_0] : memref<104x32xf32, #tpu.memory_space<vmem>>, vector<104x32xf32>
    %c0_1 = arith.constant 0 : index
    %c0_2 = arith.constant 0 : index
    %1 = vector.load %arg3[%c0_1, %c0_2] : memref<32x32xf32, #tpu.memory_space<vmem>>, vector<32x32xf32>
    %cst = arith.constant dense<0.000000e+00> : vector<104x32xf32>
    %2 = tpu.matmul %0, %1, %cst {dimension_numbers = #tpu.dot_dimension_numbers<[1], [0], [0], [1], [0, 0, 1, 1], [], []>} : vector<104x32xf32>, vector<32x32xf32>, vector<104x32xf32> -> vector<104x32xf32>
    %c0_3 = arith.constant 0 : index
    %c0_4 = arith.constant 0 : index
    %3 = vector.load %arg2[%c0_3, %c0_4] : memref<104x160xf32, #tpu.memory_space<vmem>>, vector<104x160xf32>
    %c0_5 = arith.constant 0 : index
    %c0_6 = arith.constant 0 : index
    %4 = vector.load %arg4[%c0_5, %c0_6] : memref<160x32xf32, #tpu.memory_space<vmem>>, vector<160x32xf32>
    %cst_7 = arith.constant dense<0.000000e+00> : vector<104x32xf32>
    %5 = tpu.matmul %3, %4, %cst_7 {dimension_numbers = #tpu.dot_dimension_numbers<[1], [0], [0], [1], [0, 0, 1, 1], [], []>} : vector<104x160xf32>, vector<160x32xf32>, vector<104x32xf32> -> vector<104x32xf32>
    %6 = arith.addf %2, %5 : vector<104x32xf32>
    %cst_8 = arith.constant 0.000000e+00 : f32
    %7 = vector.broadcast %cst_8 : f32 to vector<104x32xf32>
    %8 = arith.maximumf %6, %7 : vector<104x32xf32>
    %c0_9 = arith.constant 0 : index
    %c0_10 = arith.constant 0 : index
    %9 = vector.load %arg5[%c0_9, %c0_10] : memref<104x32xf32, #tpu.memory_space<vmem>>, vector<104x32xf32>
    tpu.vector_store %arg5[%c0_9, %c0_10], %8 {strides = array<i32>} : memref<104x32xf32, #tpu.memory_space<vmem>>, vector<104x32xf32>,
    return
  }
  func.func @transform_0(%arg0: i32) -> (i32, i32) {
    %c0_i32 = arith.constant 0 : i32
    %c0_i32_0 = arith.constant 0 : i32
    return %arg0, %c0_i32 : i32, i32
  }
  func.func @transform_1(%arg0: i32) -> (i32, i32) {
    %c0_i32 = arith.constant 0 : i32
    %c0_i32_0 = arith.constant 0 : i32
    return %arg0, %c0_i32 : i32, i32
  }
  func.func @transform_2(%arg0: i32) -> (i32, i32) {
    %c0_i32 = arith.constant 0 : i32
    %c0_i32_0 = arith.constant 0 : i32
    %c0_i32_1 = arith.constant 0 : i32
    return %c0_i32, %c0_i32_0 : i32, i32
  }
  func.func @transform_3(%arg0: i32) -> (i32, i32) {
    %c0_i32 = arith.constant 0 : i32
    %c0_i32_0 = arith.constant 0 : i32
    %c0_i32_1 = arith.constant 0 : i32
    return %c0_i32, %c0_i32_0 : i32, i32
  }
  func.func @transform_4(%arg0: i32) -> (i32, i32) {
    %c0_i32 = arith.constant 0 : i32
    %c0_i32_0 = arith.constant 0 : i32
    return %arg0, %c0_i32 : i32, i32
  }
}

</mosaic_0001>

<llo_original>
// kernel: mean_aggregator_forward.1
$region0: #{mean_aggregator_forward.1}
  #allocation0 [shape = 'u32[]', space=smem, size = 0x4, offset = 0x4, fixed_abs, tag = 'smem constant byte address 0x4 - core index']
  #allocation1 [shape = 'u32[144,128]{1,0:T(1,128)}', space=vmem, size = 0x12000, scoped, tag = 'internal scratch']
  %s0 = inlined_call_operand.vmem [shape: f32[203,32], index: 0, kind: input, shape index: {}]
  %s1 = inlined_call_operand.vmem [shape: f32[203,160], index: 1, kind: input, shape index: {}]
  %s2 = inlined_call_operand.vmem [shape: f32[32,32], index: 2, kind: input, shape index: {}]
  %s3 = inlined_call_operand.vmem [shape: f32[160,32], index: 3, kind: input, shape index: {}]
  %s4 = inlined_call_operand.vmem [shape: f32[203,32], index: 4, kind: output, shape index: {}]
  %s5 = sld [smem:[#allocation0]]
  $region49: #{mean_aggregator_forward.1} parent=0
    _
  %s7 = ssub.s32 1, %s5
  %s8 = scalar_select 0, %s7, %s5
  loop: start=0, step=1, limit=4
  $region2: #{mean_aggregator_forward.1} parent=0 // loop_pre_header
    _
  $region3: #{mean_aggregator_forward.1} parent=0 // loop_header
    %s10 = sphi 0, %s14
    %p11 = scmp.ge.s32.totalorder %s10, 4
    %s20 = sphi 0, %s22
    %s23 = sphi 0, %s20
    %s24 = sphi 0, %s23
    %s40 = sphi 0, %s24
    %s46 = sphi 0, %s48
    %s49 = sphi 0, %s46
    %s50 = sphi 0, %s49
    %s66 = sphi 0, %s50
    %s70 = sphi 0, %s70
    %s72 = sphi 0, %s70
    %s73 = sphi 0, %s72
    %s87 = sphi 0, %s73
    %s91 = sphi 0, %s91
    %s93 = sphi 0, %s91
    %s94 = sphi 0, %s93
    %s108 = sphi 0, %s94
    %s114 = sphi 0, %s116
    %s117 = sphi 0, %s114
    %s118 = sphi 0, %s117
    %s134 = sphi 0, %s118
  $region4: #{mean_aggregator_forward.1} parent=0 // loop_header_branch
    %13 = sbr.rel (%p11) target = $region8
  $region5: #{mean_aggregator_forward.1} parent=0 // loop_body
    %s15 = ssub.s32 %s10, 1
    %s16 = ssub.s32 %s10, 2
    %s17 = sadd.s32 %s10, 1
    %s18 = ssub.s32 %s10, %s17
    %p19 = scmp.eq.s32.totalorder %s18, 0
    %s21 = sadd.s32 %s20, 1
    %s22 = scalar_select %p19, %s20, %s21
    %p25 = pneg %p19
    %p26 = scmp.eq.s32.totalorder %s10, 1
    %p27 = por %p25, %p26
    %p28 = scmp.ne.s32.totalorder %s20, %s23
    %p29 = scmp.eq.s32.totalorder %s10, 0
    %p30 = por %p28, %p29
    %p31 = scmp.ne.s32.totalorder %s20, %s23
    %p32 = scmp.eq.s32.totalorder %s15, 1
    %p33 = por %p31, %p32
    %p34 = scmp.ne.s32.totalorder %s23, %s24
    %p35 = scmp.eq.s32.totalorder %s15, 0
    %p36 = por %p34, %p35
    %p37 = scmp.ne.s32.totalorder %s23, %s24
    %p38 = scmp.eq.s32.totalorder %s16, 1
    %p39 = por %p37, %p38
    %p41 = scmp.ne.s32.totalorder %s24, %s40
    %p42 = scmp.eq.s32.totalorder %s16, 0
    %p43 = por %p41, %p42
    %s44 = ssub.s32 %s10, %s17
    %p45 = scmp.eq.s32.totalorder %s44, 0
    %s47 = sadd.s32 %s46, 1
    %s48 = scalar_select %p45, %s46, %s47
    %p51 = pneg %p45
    %p52 = scmp.eq.s32.totalorder %s10, 1
    %p53 = por %p51, %p52
    %p54 = scmp.ne.s32.totalorder %s46, %s49
    %p55 = scmp.eq.s32.totalorder %s10, 0
    %p56 = por %p54, %p55
    %p57 = scmp.ne.s32.totalorder %s46, %s49
    %p58 = scmp.eq.s32.totalorder %s15, 1
    %p59 = por %p57, %p58
    %p60 = scmp.ne.s32.totalorder %s49, %s50
    %p61 = scmp.eq.s32.totalorder %s15, 0
    %p62 = por %p60, %p61
    %p63 = scmp.ne.s32.totalorder %s49, %s50
    %p64 = scmp.eq.s32.totalorder %s16, 1
    %p65 = por %p63, %p64
    %p67 = scmp.ne.s32.totalorder %s50, %s66
    %p68 = scmp.eq.s32.totalorder %s16, 0
    %p69 = por %p67, %p68
    %s71 = sadd.s32 %s70, 1
    %p74 = scmp.eq.s32.totalorder %s10, 1
    %p75 = scmp.ne.s32.totalorder %s70, %s72
    %p76 = scmp.eq.s32.totalorder %s10, 0
    %p77 = por %p75, %p76
    %p78 = scmp.ne.s32.totalorder %s70, %s72
    %p79 = scmp.eq.s32.totalorder %s15, 1
    %p80 = por %p78, %p79
    %p81 = scmp.ne.s32.totalorder %s72, %s73
    %p82 = scmp.eq.s32.totalorder %s15, 0
    %p83 = por %p81, %p82
    %p84 = scmp.ne.s32.totalorder %s72, %s73
    %p85 = scmp.eq.s32.totalorder %s16, 1
    %p86 = por %p84, %p85
    %p88 = scmp.ne.s32.totalorder %s73, %s87
    %p89 = scmp.eq.s32.totalorder %s16, 0
    %p90 = por %p88, %p89
    %s92 = sadd.s32 %s91, 1
    %p95 = scmp.eq.s32.totalorder %s10, 1
    %p96 = scmp.ne.s32.totalorder %s91, %s93
    %p97 = scmp.eq.s32.totalorder %s10, 0
    %p98 = por %p96, %p97
    %p99 = scmp.ne.s32.totalorder %s91, %s93
    %p100 = scmp.eq.s32.totalorder %s15, 1
    %p101 = por %p99, %p100
    %p102 = scmp.ne.s32.totalorder %s93, %s94
    %p103 = scmp.eq.s32.totalorder %s15, 0
    %p104 = por %p102, %p103
    %p105 = scmp.ne.s32.totalorder %s93, %s94
    %p106 = scmp.eq.s32.totalorder %s16, 1
    %p107 = por %p105, %p106
    %p109 = scmp.ne.s32.totalorder %s94, %s108
    %p110 = scmp.eq.s32.totalorder %s16, 0
    %p111 = por %p109, %p110
    %s112 = ssub.s32 %s10, %s17
    %p113 = scmp.eq.s32.totalorder %s112, 0
    %s115 = sadd.s32 %s114, 1
    %s116 = scalar_select %p113, %s114, %s115
    %p119 = pneg %p113
    %p120 = scmp.eq.s32.totalorder %s10, 1
    %p121 = por %p119, %p120
    %p122 = scmp.ne.s32.totalorder %s114, %s117
    %p123 = scmp.eq.s32.totalorder %s10, 0
    %p124 = por %p122, %p123
    %p125 = scmp.ne.s32.totalorder %s114, %s117
    %p126 = scmp.eq.s32.totalorder %s15, 1
    %p127 = por %p125, %p126
    %p128 = scmp.ne.s32.totalorder %s117, %s118
    %p129 = scmp.eq.s32.totalorder %s15, 0
    %p130 = por %p128, %p129
    %p131 = scmp.ne.s32.totalorder %s117, %s118
    %p132 = scmp.eq.s32.totalorder %s16, 1
    %p133 = por %p131, %p132
    %p135 = scmp.ne.s32.totalorder %s118, %s134
    %p136 = scmp.eq.s32.totalorder %s16, 0
    %p137 = por %p135, %p136
    %p138 = scmp.le.s32.totalorder 1, %s10
    %p139 = scmp.lt.s32.totalorder %s10, 3
    %p140 = pnand %p138, %p139
    %p141 = pneg %p140
    // Predicated region
    $region9: #{mean_aggregator_forward.1} parent=5 // pred_check
      _
    $region10: #{mean_aggregator_forward.1} parent=5 // pred_check_branch
      %143 = sbr.rel (%p140) target = $region12
    $region11: #{mean_aggregator_forward.1} parent=5 // pred_region
      %s144 = ssub.s32 %s10, 1
      // Predicated region
      $region13: #{mean_aggregator_forward.1} parent=11 // pred_check
        %p145 = pneg %p83
      $region14: #{mean_aggregator_forward.1} parent=11 // pred_check_branch
        %147 = sbr.rel (%p145) target = $region16
      $region15: #{mean_aggregator_forward.1} parent=11 // pred_region
        _
      $region16: #{mean_aggregator_forward.1} parent=11 // pred_fallthru
        _
      // Predicated region
      $region17: #{mean_aggregator_forward.1} parent=11 // pred_check
        %p148 = pneg %p104
      $region18: #{mean_aggregator_forward.1} parent=11 // pred_check_branch
        %150 = sbr.rel (%p148) target = $region20
      $region19: #{mean_aggregator_forward.1} parent=11 // pred_region
        _
      $region20: #{mean_aggregator_forward.1} parent=11 // pred_fallthru
        _
    $region12: #{mean_aggregator_forward.1} parent=5 // pred_fallthru
      _
    %p151 = scmp.lt.s32.totalorder %s10, 2
    // Predicated region
    $region21: #{mean_aggregator_forward.1} parent=5 // pred_check
      %p152 = pneg %p151
    $region22: #{mean_aggregator_forward.1} parent=5 // pred_check_branch
      %154 = sbr.rel (%p152) target = $region24
    $region23: #{mean_aggregator_forward.1} parent=5 // pred_region
      // Predicated region
      $region25: #{mean_aggregator_forward.1} parent=23 // pred_check
        %p155 = pneg %p30
      $region26: #{mean_aggregator_forward.1} parent=23 // pred_check_branch
        %157 = sbr.rel (%p155) target = $region28
      $region27: #{mean_aggregator_forward.1} parent=23 // pred_region
        %s158 = smul.u32 13, %s10
        %p159 = scmp.lt.s32.totalorder %s158, 25
        %s160 = scalar_select %p159, %s158, 25
        %s161 = smul.addr %s160, 8
        %s162 = scalar_lea.vmem %s0, %s161
        %s163 = smul.u32 13, %s10
      $region28: #{mean_aggregator_forward.1} parent=23 // pred_fallthru
        _
      // Predicated region
      $region29: #{mean_aggregator_forward.1} parent=23 // pred_check
        %p164 = pneg %p56
      $region30: #{mean_aggregator_forward.1} parent=23 // pred_check_branch
        %166 = sbr.rel (%p164) target = $region32
      $region31: #{mean_aggregator_forward.1} parent=23 // pred_region
        %s167 = smul.u32 13, %s10
        %p168 = scmp.lt.s32.totalorder %s167, 25
        %s169 = scalar_select %p168, %s167, 25
        %s170 = smul.addr %s169, 2
        %s171 = smul.addr %s170, 8
        %s172 = scalar_lea.vmem %s1, %s171
        %s173 = smul.u32 13, %s10
      $region32: #{mean_aggregator_forward.1} parent=23 // pred_fallthru
        _
    $region24: #{mean_aggregator_forward.1} parent=5 // pred_fallthru
      _
    %p174 = scmp.le.s32.totalorder 1, %s10
    %p175 = scmp.lt.s32.totalorder %s10, 3
    %p176 = pnand %p174, %p175
    %p177 = pneg %p176
    // Predicated region
    $region33: #{mean_aggregator_forward.1} parent=5 // pred_check
      _
    $region34: #{mean_aggregator_forward.1} parent=5 // pred_check_branch
      %179 = sbr.rel (%p176) target = $region36
    $region35: #{mean_aggregator_forward.1} parent=5 // pred_region
      %s180 = ssub.s32 %s10, 1
      %s181 = smul.u32 13, %s15
      %p182 = scmp.lt.s32.totalorder %s181, 25
      %s183 = scalar_select %p182, %s181, 25
      %s184 = smul.addr %s183, 8
      %s185 = scalar_lea.vmem %s0, %s184
      %p186 = pneg %p36
      %p187 = pneg %p33
      %s188 = smul.u32 13, %s15
      %p189 = scmp.lt.s32.totalorder %s188, 25
      %s190 = scalar_select %p189, %s188, 25
      %s191 = smul.addr %s190, 2
      %s192 = smul.addr %s191, 8
      %s193 = scalar_lea.vmem %s1, %s192
      %p194 = pneg %p62
      %p195 = pneg %p59
      %p196 = pneg %p83
      %p197 = pneg %p80
      %p198 = pneg %p104
      %p199 = pneg %p101
      %p200 = pneg %p130
      %p201 = pneg %p127
      %s202 = smul.u32 13, %s15
      %p203 = scmp.lt.s32.totalorder %s202, 25
      %s204 = scalar_select %p203, %s202, 25
      %s205 = smul.addr %s204, 8
      %s206 = scalar_lea.vmem %s4, %s205
      %s207 = smul.u32 13, %s15
      %p208 = scmp.lt.s32.totalorder %s207, 25
      %s209 = scalar_select %p208, %s207, 25
      %s210 = smul.addr %s209, 8
      %s211 = scalar_lea.vmem %s0, %s210
      %s212 = smul.u32 13, %s15
      %s213 = smul.u32 13, %s15
      %p214 = scmp.lt.s32.totalorder %s213, 25
      %s215 = scalar_select %p214, %s213, 25
      %s216 = smul.addr %s215, 2
      %s217 = smul.addr %s216, 8
      %s218 = scalar_lea.vmem %s1, %s217
      %s219 = smul.u32 13, %s15
      %s220 = smul.u32 13, %s15
      %p221 = scmp.lt.s32.totalorder %s220, 25
      %s222 = scalar_select %p221, %s220, 25
      %s223 = smul.addr %s222, 8
      %s224 = scalar_lea.vmem %s4, %s223
      %s225 = smul.u32 13, %s15
      %v226 = vld [vmem:[%s211] sm:$0xff]
      %v227 = vld [vmem:[%s211 + $0x8] sm:$0xff]
      %v228 = vld [vmem:[%s211 + $0x10] sm:$0xff]
      %v229 = vld [vmem:[%s211 + $0x18] sm:$0xff]
      %v230 = vld [vmem:[%s211 + $0x20] sm:$0xff]
      %v231 = vld [vmem:[%s211 + $0x28] sm:$0xff]
      %v232 = vld [vmem:[%s211 + $0x30] sm:$0xff]
      %v233 = vld [vmem:[%s211 + $0x38] sm:$0xff]
      %v234 = vld [vmem:[%s211 + $0x40] sm:$0xff]
      %v235 = vld [vmem:[%s211 + $0x48] sm:$0xff]
      %v236 = vld [vmem:[%s211 + $0x50] sm:$0xff]
      %v237 = vld [vmem:[%s211 + $0x58] sm:$0xff]
      %v238 = vld [vmem:[%s211 + $0x60] sm:$0xff]
      %v239 = vld [vmem:[%s2] sm:$0xff]
      %v240 = vld [vmem:[%s2 + $0x8] sm:$0xff]
      %v241 = vld [vmem:[%s2 + $0x10] sm:$0xff]
      %v242 = vld [vmem:[%s2 + $0x18] sm:$0xff]
      %v243 = vld [vmem:[%s218] sm:$0xff]
      %v244 = vld [vmem:[%s218 + $0x8] sm:$0xff]
      %v245 = vld [vmem:[%s218 + $0x10] sm:$0xff]
      %v246 = vld [vmem:[%s218 + $0x18] sm:$0xff]
      %v247 = vld [vmem:[%s218 + $0x20] sm:$0xff]
      %v248 = vld [vmem:[%s218 + $0x28] sm:$0xff]
      %v249 = vld [vmem:[%s218 + $0x30] sm:$0xff]
      %v250 = vld [vmem:[%s218 + $0x38] sm:$0xff]
      %v251 = vld [vmem:[%s218 + $0x40] sm:$0xff]
      %v252 = vld [vmem:[%s218 + $0x48] sm:$0xff]
      %v253 = vld [vmem:[%s218 + $0x50] sm:$0xff]
      %v254 = vld [vmem:[%s218 + $0x58] sm:$0xff]
      %v255 = vld [vmem:[%s218 + $0x60] sm:$0xff]
      %v256 = vld [vmem:[%s218 + $0x68] sm:$0xff]
      %v257 = vld [vmem:[%s218 + $0x70] sm:$0xff]
      %v258 = vld [vmem:[%s218 + $0x78] sm:$0xff]
      %v259 = vld [vmem:[%s218 + $0x80] sm:$0xff]
      %v260 = vld [vmem:[%s218 + $0x88] sm:$0xff]
      %v261 = vld [vmem:[%s218 + $0x90] sm:$0xff]
      %v262 = vld [vmem:[%s218 + $0x98] sm:$0xff]
      %v263 = vld [vmem:[%s218 + $0xa0] sm:$0xff]
      %v264 = vld [vmem:[%s218 + $0xa8] sm:$0xff]
      %v265 = vld [vmem:[%s218 + $0xb0] sm:$0xff]
      %v266 = vld [vmem:[%s218 + $0xb8] sm:$0xff]
      %v267 = vld [vmem:[%s218 + $0xc0] sm:$0xff]
      %v268 = vld [vmem:[%s218 + $0xc8] sm:$0xff]
      %v269 = vld [vmem:[%s3] sm:$0xff]
      %v270 = vld [vmem:[%s3 + $0x8] sm:$0xff]
      %v271 = vld [vmem:[%s3 + $0x10] sm:$0xff]
      %v272 = vld [vmem:[%s3 + $0x18] sm:$0xff]
      %v273 = vld [vmem:[%s3 + $0x20] sm:$0xff]
      %v274 = vld [vmem:[%s3 + $0x28] sm:$0xff]
      %v275 = vld [vmem:[%s3 + $0x30] sm:$0xff]
      %v276 = vld [vmem:[%s3 + $0x38] sm:$0xff]
      %v277 = vld [vmem:[%s3 + $0x40] sm:$0xff]
      %v278 = vld [vmem:[%s3 + $0x48] sm:$0xff]
      %v279 = vld [vmem:[%s3 + $0x50] sm:$0xff]
      %v280 = vld [vmem:[%s3 + $0x58] sm:$0xff]
      %v281 = vld [vmem:[%s3 + $0x60] sm:$0xff]
      %v282 = vld [vmem:[%s3 + $0x68] sm:$0xff]
      %v283 = vld [vmem:[%s3 + $0x70] sm:$0xff]
      %v284 = vld [vmem:[%s3 + $0x78] sm:$0xff]
      %v285 = vld [vmem:[%s3 + $0x80] sm:$0xff]
      %v286 = vld [vmem:[%s3 + $0x88] sm:$0xff]
      %v287 = vld [vmem:[%s3 + $0x90] sm:$0xff]
      %v288 = vld [vmem:[%s3 + $0x98] sm:$0xff]
      %vm289 = vcmask 261120
      %v291 = vsel %vm289, %v244, 0
      %v294 = vsel %vm289, %v246, 0
      %v297 = vsel %vm289, %v248, 0
      %v300 = vsel %vm289, %v250, 0
      %v303 = vsel %vm289, %v252, 0
      %v306 = vsel %vm289, %v254, 0
      %v309 = vsel %vm289, %v256, 0
      %v312 = vsel %vm289, %v258, 0
      %v315 = vsel %vm289, %v260, 0
      %v318 = vsel %vm289, %v262, 0
      %v321 = vsel %vm289, %v264, 0
      %v324 = vsel %vm289, %v266, 0
      %v327 = vsel %vm289, %v268, 0
      %329 = vmatprep.subr.mxu0 0.0
      %330 = vmatpush1.msra.mxu0 %v269
      %331 = vmatprep.subr.mxu0 0.0
      %332 = vmatpush1.msra.mxu0 %v270
      %333 = vmatprep.subr.mxu0 0.0
      %334 = vmatpush1.msra.mxu0 %v271
      %335 = vmatprep.subr.mxu0 0.0
      %336 = vmatpush1.msra.mxu0 %v272
      %337 = vmatprep.subr.mxu0 0.0
      %338 = vmatpush1.msra.mxu0 %v273
      %339 = vmatprep.subr.mxu0 0.0
      %340 = vmatpush1.msra.mxu0 %v274
      %341 = vmatprep.subr.mxu0 0.0
      %342 = vmatpush1.msra.mxu0 %v275
      %343 = vmatprep.subr.mxu0 0.0
      %344 = vmatpush1.msra.mxu0 %v276
      %345 = vmatprep.subr.mxu0 0.0
      %346 = vmatpush1.msra.mxu0 %v277
      %347 = vmatprep.subr.mxu0 0.0
      %348 = vmatpush1.msra.mxu0 %v278
      %349 = vmatprep.subr.mxu0 0.0
      %350 = vmatpush1.msra.mxu0 %v279
      %351 = vmatprep.subr.mxu0 0.0
      %352 = vmatpush1.msra.mxu0 %v280
      %353 = vmatprep.subr.mxu0 0.0
      %354 = vmatpush1.msra.mxu0 %v281
      %355 = vmatprep.subr.mxu0 0.0
      %356 = vmatpush1.msra.mxu0 %v282
      %357 = vmatprep.subr.mxu0 0.0
      %358 = vmatpush1.msra.mxu0 %v283
      %359 = vmatprep.subr.mxu0 0.0
      %360 = vmatpush1.msra.mxu0 %v284
      %361 = vmatprep.subr.mxu0 0.0
      %362 = vmatpush1.msra.mxu0 %v285
      %363 = vmatprep.subr.mxu0 0.0
      %364 = vmatpush1.msra.mxu0 %v286
      %365 = vmatprep.subr.mxu0 0.0
      %366 = vmatpush1.msra.mxu0 %v287
      %367 = vmatprep.subr.mxu0 0.0
      %368 = vmatpush1.msra.mxu0 %v288
      %369 = vmatprep.subr.mxu0 0.0
      %370 = vmatpush1.msra.mxu0 0.0
      %371 = vmatprep.subr.mxu0 0.0
      %372 = vmatpush1.msra.mxu0 0.0
      %373 = vmatprep.subr.mxu0 0.0
      %374 = vmatpush1.msra.mxu0 0.0
      %375 = vmatprep.subr.mxu0 0.0
      %376 = vmatpush1.msra.mxu0 0.0
      %377 = vmatprep.subr.mxu0 0.0
      %378 = vmatpush1.msra.mxu0 0.0
      %379 = vmatprep.subr.mxu0 0.0
      %380 = vmatpush1.msra.mxu0 0.0
      %381 = vmatprep.subr.mxu0 0.0
      %382 = vmatpush1.msra.mxu0 0.0
      %383 = vmatprep.subr.mxu0 0.0
      %384 = vmatpush1.msra.mxu0 0.0
      %385 = vmatprep.subr.mxu0 0.0
      %386 = vmatpush1.msra.mxu0 0.0
      %387 = vmatprep.subr.mxu0 0.0
      %388 = vmatpush1.msra.mxu0 0.0
      %389 = vmatprep.subr.mxu0 0.0
      %390 = vmatpush1.msra.mxu0 0.0
      %391 = vmatprep.subr.mxu0 0.0
      %392 = vmatpush1.msra.mxu0 0.0
      %393 = vmatprep.mubr.f32.mxu0 %v291
      %394 = vmatmul.mubr.f32.gmra.mrb[0].mxu0 %v243
      %v395 = vpop.f32.mrb[0].mxu0
      %v396 = vadd.f32 0.0, %v395
      %v397 = vpop.f32.mrb[0].mxu0
      %398 = vmatprep.mubr.f32.mxu0 %v294
      %399 = vmatmul.mubr.f32.gmra.mrb[0].mxu0 %v245
      %v400 = vpop.f32.mrb[0].mxu0
      %v401 = vadd.f32 0.0, %v400
      %v402 = vpop.f32.mrb[0].mxu0
      %403 = vmatprep.mubr.f32.mxu0 %v297
      %404 = vmatmul.mubr.f32.gmra.mrb[0].mxu0 %v247
      %v405 = vpop.f32.mrb[0].mxu0
      %v406 = vadd.f32 0.0, %v405
      %v407 = vpop.f32.mrb[0].mxu0
      %408 = vmatprep.mubr.f32.mxu0 %v300
      %409 = vmatmul.mubr.f32.gmra.mrb[0].mxu0 %v249
      %v410 = vpop.f32.mrb[0].mxu0
      %v411 = vadd.f32 0.0, %v410
      %v412 = vpop.f32.mrb[0].mxu0
      %413 = vmatprep.mubr.f32.mxu0 %v303
      %414 = vmatmul.mubr.f32.gmra.mrb[0].mxu0 %v251
      %v415 = vpop.f32.mrb[0].mxu0
      %v416 = vadd.f32 0.0, %v415
      %v417 = vpop.f32.mrb[0].mxu0
      %418 = vmatprep.mubr.f32.mxu0 %v306
      %419 = vmatmul.mubr.f32.gmra.mrb[0].mxu0 %v253
      %v420 = vpop.f32.mrb[0].mxu0
      %v421 = vadd.f32 0.0, %v420
      %v422 = vpop.f32.mrb[0].mxu0
      %423 = vmatprep.mubr.f32.mxu0 %v309
      %424 = vmatmul.mubr.f32.gmra.mrb[0].mxu0 %v255
      %v425 = vpop.f32.mrb[0].mxu0
      %v426 = vadd.f32 0.0, %v425
      %v427 = vpop.f32.mrb[0].mxu0
      %428 = vmatprep.mubr.f32.mxu0 %v312
      %429 = vmatmul.mubr.f32.gmra.mrb[0].mxu0 %v257
      %v430 = vpop.f32.mrb[0].mxu0
      %v431 = vadd.f32 0.0, %v430
      %v432 = vpop.f32.mrb[0].mxu0
      %433 = vmatprep.mubr.f32.mxu0 %v315
      %434 = vmatmul.mubr.f32.gmra.mrb[0].mxu0 %v259
      %v435 = vpop.f32.mrb[0].mxu0
      %v436 = vadd.f32 0.0, %v435
      %v437 = vpop.f32.mrb[0].mxu0
      %438 = vmatprep.mubr.f32.mxu0 %v318
      %439 = vmatmul.mubr.f32.gmra.mrb[0].mxu0 %v261
      %v440 = vpop.f32.mrb[0].mxu0
      %v441 = vadd.f32 0.0, %v440
      %v442 = vpop.f32.mrb[0].mxu0
      %443 = vmatprep.mubr.f32.mxu0 %v321
      %444 = vmatmul.mubr.f32.gmra.mrb[0].mxu0 %v263
      %v445 = vpop.f32.mrb[0].mxu0
      %v446 = vadd.f32 0.0, %v445
      %v447 = vpop.f32.mrb[0].mxu0
      %448 = vmatprep.mubr.f32.mxu0 %v324
      %449 = vmatmul.mubr.f32.gmra.mrb[0].mxu0 %v265
      %v450 = vpop.f32.mrb[0].mxu0
      %v451 = vadd.f32 0.0, %v450
      %v452 = vpop.f32.mrb[0].mxu0
      %453 = vmatprep.mubr.f32.mxu0 %v327
      %454 = vmatmul.mubr.f32.gmra.mrb[0].mxu0 %v267
      %v455 = vpop.f32.mrb[0].mxu0
      %v456 = vadd.f32 0.0, %v455
      %v457 = vpop.f32.mrb[0].mxu0
      %458 = vdwg.mxu0
      %v460 = vsel %vm289, %v226, 0
      %v463 = vsel %vm289, %v227, 0
      %v466 = vsel %vm289, %v228, 0
      %v469 = vsel %vm289, %v229, 0
      %v472 = vsel %vm289, %v230, 0
      %v475 = vsel %vm289, %v231, 0
      %v478 = vsel %vm289, %v232, 0
      %v481 = vsel %vm289, %v233, 0
      %v484 = vsel %vm289, %v234, 0
      %v487 = vsel %vm289, %v235, 0
      %v490 = vsel %vm289, %v236, 0
      %v493 = vsel %vm289, %v237, 0
      %v496 = vsel %vm289, %v238, 0
      %498 = vmatprep.subr.mxu0 0.0
      %499 = vmatpush1.msra.mxu0 %v239
      %500 = vmatprep.subr.mxu0 0.0
      %501 = vmatpush1.msra.mxu0 %v240
      %502 = vmatprep.subr.mxu0 0.0
      %503 = vmatpush1.msra.mxu0 %v241
      %504 = vmatprep.subr.mxu0 0.0
      %505 = vmatpush1.msra.mxu0 %v242
      %506 = vmatprep.subr.mxu0 0.0
      %507 = vmatpush1.msra.mxu0 0.0
      %508 = vmatprep.subr.mxu0 0.0
      %509 = vmatpush1.msra.mxu0 0.0
      %510 = vmatprep.subr.mxu0 0.0
      %511 = vmatpush1.msra.mxu0 0.0
      %512 = vmatprep.subr.mxu0 0.0
      %513 = vmatpush1.msra.mxu0 0.0
      %514 = vmatprep.subr.mxu0 0.0
      %515 = vmatpush1.msra.mxu0 0.0
      %516 = vmatprep.subr.mxu0 0.0
      %517 = vmatpush1.msra.mxu0 0.0
      %518 = vmatprep.subr.mxu0 0.0
      %519 = vmatpush1.msra.mxu0 0.0
      %520 = vmatprep.subr.mxu0 0.0
      %521 = vmatpush1.msra.mxu0 0.0
      %522 = vmatprep.subr.mxu0 0.0
      %523 = vmatpush1.msra.mxu0 0.0
      %524 = vmatprep.subr.mxu0 0.0
      %525 = vmatpush1.msra.mxu0 0.0
      %526 = vmatprep.subr.mxu0 0.0
      %527 = vmatpush1.msra.mxu0 0.0
      %528 = vmatprep.subr.mxu0 0.0
      %529 = vmatpush1.msra.mxu0 0.0
      %530 = vmatprep.subr.mxu0 0.0
      %531 = vmatpush1.msra.mxu0 0.0
      %532 = vmatprep.subr.mxu0 0.0
      %533 = vmatpush1.msra.mxu0 0.0
      %534 = vmatprep.subr.mxu0 0.0
      %535 = vmatpush1.msra.mxu0 0.0
      %536 = vmatprep.subr.mxu0 0.0
      %537 = vmatpush1.msra.mxu0 0.0
      %538 = vmatprep.subr.mxu0 0.0
      %539 = vmatpush1.msra.mxu0 0.0
      %540 = vmatprep.subr.mxu0 0.0
      %541 = vmatpush1.msra.mxu0 0.0
      %542 = vmatprep.subr.mxu0 0.0
      %543 = vmatpush1.msra.mxu0 0.0
      %544 = vmatprep.subr.mxu0 0.0
      %545 = vmatpush1.msra.mxu0 0.0
      %546 = vmatprep.subr.mxu0 0.0
      %547 = vmatpush1.msra.mxu0 0.0
      %548 = vmatprep.subr.mxu0 0.0
      %549 = vmatpush1.msra.mxu0 0.0
      %550 = vmatprep.subr.mxu0 0.0
      %551 = vmatpush1.msra.mxu0 0.0
      %552 = vmatprep.subr.mxu0 0.0
      %553 = vmatpush1.msra.mxu0 0.0
      %554 = vmatprep.subr.mxu0 0.0
      %555 = vmatpush1.msra.mxu0 0.0
      %556 = vmatprep.subr.mxu0 0.0
      %557 = vmatpush1.msra.mxu0 0.0
      %558 = vmatprep.subr.mxu0 0.0
      %559 = vmatpush1.msra.mxu0 0.0
      %560 = vmatprep.subr.mxu0 0.0
      %561 = vmatpush1.msra.mxu0 0.0
      %562 = vmatprep.mubr.f32.mxu0 0.0
      %563 = vmatmul.mubr.f32.gmra.mrb[0].mxu0 %v460
      %v564 = vpop.f32.mrb[0].mxu0
      %v565 = vadd.f32 %v396, %v564
      %v566 = vpop.f32.mrb[0].mxu0
      %567 = vmatprep.mubr.f32.mxu0 0.0
      %568 = vmatmul.mubr.f32.gmra.mrb[0].mxu0 %v463
      %v569 = vpop.f32.mrb[0].mxu0
      %v570 = vadd.f32 %v401, %v569
      %v571 = vpop.f32.mrb[0].mxu0
      %572 = vmatprep.mubr.f32.mxu0 0.0
      %573 = vmatmul.mubr.f32.gmra.mrb[0].mxu0 %v466
      %v574 = vpop.f32.mrb[0].mxu0
      %v575 = vadd.f32 %v406, %v574
      %v576 = vpop.f32.mrb[0].mxu0
      %577 = vmatprep.mubr.f32.mxu0 0.0
      %578 = vmatmul.mubr.f32.gmra.mrb[0].mxu0 %v469
      %v579 = vpop.f32.mrb[0].mxu0
      %v580 = vadd.f32 %v411, %v579
      %v581 = vpop.f32.mrb[0].mxu0
      %582 = vmatprep.mubr.f32.mxu0 0.0
      %583 = vmatmul.mubr.f32.gmra.mrb[0].mxu0 %v472
      %v584 = vpop.f32.mrb[0].mxu0
      %v585 = vadd.f32 %v416, %v584
      %v586 = vpop.f32.mrb[0].mxu0
      %587 = vmatprep.mubr.f32.mxu0 0.0
      %588 = vmatmul.mubr.f32.gmra.mrb[0].mxu0 %v475
      %v589 = vpop.f32.mrb[0].mxu0
      %v590 = vadd.f32 %v421, %v589
      %v591 = vpop.f32.mrb[0].mxu0
      %592 = vmatprep.mubr.f32.mxu0 0.0
      %593 = vmatmul.mubr.f32.gmra.mrb[0].mxu0 %v478
      %v594 = vpop.f32.mrb[0].mxu0
      %v595 = vadd.f32 %v426, %v594
      %v596 = vpop.f32.mrb[0].mxu0
      %597 = vmatprep.mubr.f32.mxu0 0.0
      %598 = vmatmul.mubr.f32.gmra.mrb[0].mxu0 %v481
      %v599 = vpop.f32.mrb[0].mxu0
      %v600 = vadd.f32 %v431, %v599
      %v601 = vpop.f32.mrb[0].mxu0
      %602 = vmatprep.mubr.f32.mxu0 0.0
      %603 = vmatmul.mubr.f32.gmra.mrb[0].mxu0 %v484
      %v604 = vpop.f32.mrb[0].mxu0
      %v605 = vadd.f32 %v436, %v604
      %v606 = vpop.f32.mrb[0].mxu0
      %607 = vmatprep.mubr.f32.mxu0 0.0
      %608 = vmatmul.mubr.f32.gmra.mrb[0].mxu0 %v487
      %v609 = vpop.f32.mrb[0].mxu0
      %v610 = vadd.f32 %v441, %v609
      %v611 = vpop.f32.mrb[0].mxu0
      %612 = vmatprep.mubr.f32.mxu0 0.0
      %613 = vmatmul.mubr.f32.gmra.mrb[0].mxu0 %v490
      %v614 = vpop.f32.mrb[0].mxu0
      %v615 = vadd.f32 %v446, %v614
      %v616 = vpop.f32.mrb[0].mxu0
      %617 = vmatprep.mubr.f32.mxu0 0.0
      %618 = vmatmul.mubr.f32.gmra.mrb[0].mxu0 %v493
      %v619 = vpop.f32.mrb[0].mxu0
      %v620 = vadd.f32 %v451, %v619
      %v621 = vpop.f32.mrb[0].mxu0
      %622 = vmatprep.mubr.f32.mxu0 0.0
      %623 = vmatmul.mubr.f32.gmra.mrb[0].mxu0 %v496
      %v624 = vpop.f32.mrb[0].mxu0
      %v625 = vadd.f32 %v456, %v624
      %v626 = vpop.f32.mrb[0].mxu0
      %627 = vdwg.mxu0
      %v628 = vmax.f32 %v565, 0.0
      %v629 = vmax.f32 %v570, 0.0
      %v630 = vmax.f32 %v575, 0.0
      %v631 = vmax.f32 %v580, 0.0
      %v632 = vmax.f32 %v585, 0.0
      %v633 = vmax.f32 %v590, 0.0
      %v634 = vmax.f32 %v595, 0.0
      %v635 = vmax.f32 %v600, 0.0
      %v636 = vmax.f32 %v605, 0.0
      %v637 = vmax.f32 %v610, 0.0
      %v638 = vmax.f32 %v615, 0.0
      %v639 = vmax.f32 %v620, 0.0
      %v640 = vmax.f32 %v625, 0.0
      %641 = vst.msk [vmem:[%s224] sm:$0xff] %vm289, %v628
      %642 = vst.msk [vmem:[%s224 + $0x8] sm:$0xff] %vm289, %v629
      %643 = vst.msk [vmem:[%s224 + $0x10] sm:$0xff] %vm289, %v630
      %644 = vst.msk [vmem:[%s224 + $0x18] sm:$0xff] %vm289, %v631
      %645 = vst.msk [vmem:[%s224 + $0x20] sm:$0xff] %vm289, %v632
      %646 = vst.msk [vmem:[%s224 + $0x28] sm:$0xff] %vm289, %v633
      %647 = vst.msk [vmem:[%s224 + $0x30] sm:$0xff] %vm289, %v634
      %648 = vst.msk [vmem:[%s224 + $0x38] sm:$0xff] %vm289, %v635
      %649 = vst.msk [vmem:[%s224 + $0x40] sm:$0xff] %vm289, %v636
      %650 = vst.msk [vmem:[%s224 + $0x48] sm:$0xff] %vm289, %v637
      %651 = vst.msk [vmem:[%s224 + $0x50] sm:$0xff] %vm289, %v638
      %652 = vst.msk [vmem:[%s224 + $0x58] sm:$0xff] %vm289, %v639
      %653 = vst.msk [vmem:[%s224 + $0x60] sm:$0xff] %vm289, %v640
      %s654 = smul.u32 13, %s15
      %p655 = scmp.lt.s32.totalorder %s654, 25
      %s656 = scalar_select %p655, %s654, 25
      %s657 = smul.addr %s656, 8
      %s658 = scalar_lea.vmem %s4, %s657
      // Predicated region
      $region37: #{mean_aggregator_forward.1} parent=35 // pred_check
        %p659 = pneg %p127
      $region38: #{mean_aggregator_forward.1} parent=35 // pred_check_branch
        %661 = sbr.rel (%p659) target = $region40
      $region39: #{mean_aggregator_forward.1} parent=35 // pred_region
        %s662 = smul.u32 13, %s15
      $region40: #{mean_aggregator_forward.1} parent=35 // pred_fallthru
        _
    $region36: #{mean_aggregator_forward.1} parent=5 // pred_fallthru
      _
    %p663 = scmp.le.s32.totalorder 2, %s10
    // Predicated region
    $region41: #{mean_aggregator_forward.1} parent=5 // pred_check
      %p664 = pneg %p663
    $region42: #{mean_aggregator_forward.1} parent=5 // pred_check_branch
      %666 = sbr.rel (%p664) target = $region44
    $region43: #{mean_aggregator_forward.1} parent=5 // pred_region
      %s667 = ssub.s32 %s10, 2
      // Predicated region
      $region45: #{mean_aggregator_forward.1} parent=43 // pred_check
        %p668 = pneg %p133
      $region46: #{mean_aggregator_forward.1} parent=43 // pred_check_branch
        %670 = sbr.rel (%p668) target = $region48
      $region47: #{mean_aggregator_forward.1} parent=43 // pred_region
        %s671 = smul.u32 13, %s16
        %p672 = scmp.lt.s32.totalorder %s671, 25
        %s673 = scalar_select %p672, %s671, 25
        %s674 = smul.addr %s673, 8
        %s675 = scalar_lea.vmem %s4, %s674
      $region48: #{mean_aggregator_forward.1} parent=43 // pred_fallthru
        _
    $region44: #{mean_aggregator_forward.1} parent=5 // pred_fallthru
      _
  $region6: #{mean_aggregator_forward.1} parent=0 // loop_footer
    %s14 = sadd.s32 1, %s10
  $region7: #{mean_aggregator_forward.1} parent=0 // loop_footer_branch
    %9 = sbr.rel target = $region3
  $region8: #{mean_aggregator_forward.1} parent=0 // loop_exit
    _

</llo_original>
